<compile_context>
chip_gen: v7x
topology: tpu7x:2x2x1
jax: 0.10.0
libtpu: 0.0.40
codegen_flags: <defaults>
</compile_context>

<pallas_src>
import functools

import jax
import jax.numpy as jnp
from jax import lax
from jax.experimental import pallas as pl
from jax.experimental.pallas import tpu as pltpu


# Contract the last dim of both operands ("A @ B^T" / NT form) -- same dim-numbers
# the reference flash-attention kernel uses for q @ k^T.
_NT_DIMS = (((1,), (1,)), ((), ()))
_LANE = 128


def adapter_kernel(x_ref, wefft_ref, beff_ref, w2_ref, b2_ref, o_ref):
    """One batch tile.

    x_ref     : (TILE_B, D_in)       batch tile (streamed, double-buffered; f32 or bf16)
    wefft_ref : (H, D_in)            (base_w @ w1)^T        (resident, x.dtype)
    beff_ref  : (H, 1)        f32    (base_b @ w1 + b1)^T   (resident)
    w2_ref    : (H, 1)        f32    adapter layer-2 weight (resident)
    b2_ref    : (1, 1)        f32    adapter layer-2 bias   (SMEM scalar)
    o_ref     : (1, TILE_B)   f32    lane-dense output row
    """
    # Fused (base Linear + adapter layer-1), batch on lanes:
    # (H, D_in) x (TILE_B, D_in)^T -> (H, TILE_B), f32 accumulation on the MXU.
    ht = lax.dot_general(wefft_ref[...], x_ref[...], _NT_DIMS,
                         preferred_element_type=jnp.float32)
    ht = jnp.maximum(ht + beff_ref[...], 0.0)                 # bias + ReLU (VPU)

    # Adapter layer-2 (H -> 1) as VPU multiply + sublane (XLU) reduce; result is
    # already lane-major -> unmasked lane-dense store.
    y = jnp.sum(ht * w2_ref[...], axis=0, keepdims=True)      # (1, TILE_B)
    o_ref[...] = (y + b2_ref[0, 0]).astype(o_ref.dtype)


def _round_up(n, m):
    return (n + m - 1) // m * m


def _pick_tile_b(batch, d_in, h, itemsize):
    """Batch-tile heuristic: amortize per-step overhead, respect VMEM, keep megacore fed."""
    d_pad = _round_up(d_in, _LANE)                  # lane-padded footprint of one x row
    # (1) aim for >= ~2 MiB of *real* x payload per grid step (~0.35us step overhead).
    tile = _round_up(max(_LANE, (2 << 20) // max(1, d_in * itemsize)), _LANE)
    # (2) VMEM cap with lane padding included: double-buffered x tile + (H, tile) f32
    #     intermediate + double-buffered sublane-padded (1, tile) output; keep <= ~24 MiB
    #     under the 32 MiB scoped default (v7x has only 64 MiB physical VMEM total).
    per_row = 2 * d_pad * itemsize + h * 4 + 2 * 8 * 4
    tile = min(tile, max(_LANE, ((24 << 20) // per_row) // _LANE * _LANE))
    # (3) never bigger than the 128-rounded batch.
    tile = min(tile, _round_up(batch, _LANE))
    # (4) keep >= ~8 grid steps when the batch allows it (i+1 prefetch overlap and both
    #     v7x TensorCores busy on the "parallel" batch axis).
    if batch >= 8 * _LANE:
        tile = min(tile, max(_LANE, _round_up(-(-batch // 8), _LANE)))
    return max(_LANE, tile)


@functools.partial(jax.jit, static_argnames=("tile_b",))
def small_business_adapter(x, base_w, base_b, w1, b1, w2, b2, *, tile_b=None):
    """x: (B, D_in) f32/bf16. Weights passed pre-transposed as (in, out); biases (1, out).

    Returns (B, 1) f32 == adapter(base(x)).
    """
    B, d_in = x.shape
    h = w1.shape[1]

    # --- exact algebraic fold of the frozen base Linear and adapter layer-1 (in f32) ---
    w_eff_t = jnp.transpose(base_w.astype(jnp.float32) @ w1.astype(jnp.float32))   # (H, D_in)
    b_eff = jnp.transpose(base_b.astype(jnp.float32) @ w1.astype(jnp.float32)
                          + b1.astype(jnp.float32))                                # (H, 1)
    w_eff_t = w_eff_t.astype(x.dtype)              # match streamed dtype for the MXU dot
    w2_col = w2.reshape(h, 1).astype(jnp.float32)  # (H, 1)
    b2_s = b2.reshape(1, 1).astype(jnp.float32)    # (1, 1) -> SMEM scalar

    if tile_b is None:
        tile_b = _pick_tile_b(B, d_in, h, x.dtype.itemsize)

    # No padding / no extra HBM copy of x: ragged last block is handled by Pallas
    # (OOB rows read garbage, OOB output lanes are masked on store / sliced below).
    grid = (pl.cdiv(B, tile_b),)

    cost = pl.CostEstimate(
        flops=2 * B * d_in * h + 2 * B * h,
        transcendentals=0,
        bytes_accessed=B * d_in * x.dtype.itemsize + B * 4
        + w_eff_t.size * x.dtype.itemsize + (b_eff.size + w2_col.size + 1) * 4,
    )

    out = pl.pallas_call(
        adapter_kernel,
        out_shape=jax.ShapeDtypeStruct((1, B), jnp.float32),
        grid=grid,
        in_specs=[
            pl.BlockSpec((tile_b, d_in), lambda i: (i, 0)),      # x: streamed batch tiles
            pl.BlockSpec((h, d_in), lambda i: (0, 0)),           # W_eff^T: resident
            pl.BlockSpec((h, 1), lambda i: (0, 0)),              # b_eff:   resident
            pl.BlockSpec((h, 1), lambda i: (0, 0)),              # w2:      resident
            pl.BlockSpec(memory_space=pltpu.MemorySpace.SMEM),   # b2 scalar in SMEM
        ],
        out_specs=pl.BlockSpec((1, tile_b), lambda i: (0, i)),   # lane-dense output row
        compiler_params=pltpu.CompilerParams(
            dimension_semantics=("parallel",),   # batch axis -> both TCs on v7x megacore
        ),
        cost_estimate=cost,
    )(x, w_eff_t, b_eff, w2_col, b2_s)

    return out[0, :B].reshape(B, 1)


def reference(x, base_w, base_b, w1, b1, w2, b2):
    h0 = x @ base_w + base_b
    h1 = jnp.maximum(h0 @ w1 + b1, 0.0)
    return h1 @ w2 + b2


if __name__ == "__main__":
    key = jax.random.PRNGKey(0)
    k_x, k_bw, k_bb, k_w1, k_b1, k_w2, k_b2, k_x2 = jax.random.split(key, 8)

    B, D_in, H = 8, 16, 32  # batch, base input features, adapter hidden

    # deterministic synthetic parameters (no checkpoint load)
    x = jax.random.normal(k_x, (B, D_in), dtype=jnp.float32)
    base_w = jax.random.normal(k_bw, (D_in, 1), dtype=jnp.float32) * 0.1   # frozen base Linear(D_in,1)
    base_b = jax.random.normal(k_bb, (1, 1), dtype=jnp.float32) * 0.1
    w1 = jax.random.normal(k_w1, (1, H), dtype=jnp.float32) * 0.1          # adapter Linear(1,32)
    b1 = jax.random.normal(k_b1, (1, H), dtype=jnp.float32) * 0.1
    w2 = jax.random.normal(k_w2, (H, 1), dtype=jnp.float32) * 0.1          # adapter Linear(32,1)
    b2 = jax.random.normal(k_b2, (1, 1), dtype=jnp.float32) * 0.1

    out = jax.block_until_ready(small_business_adapter(x, base_w, base_b, w1, b1, w2, b2))
    ref = reference(x, base_w, base_b, w1, b1, w2, b2)
    assert out.shape == (B, 1), out.shape
    assert jnp.allclose(out, ref, atol=1e-5, rtol=1e-4), "mismatch vs reference (B=8)"

    # Second check: batch not a multiple of 128 exercises the ragged last block
    # (no jnp.pad copy of x is ever made).
    B2 = 1000
    x2 = jax.random.normal(k_x2, (B2, D_in), dtype=jnp.float32)
    out2 = jax.block_until_ready(small_business_adapter(x2, base_w, base_b, w1, b1, w2, b2))
    ref2 = reference(x2, base_w, base_b, w1, b1, w2, b2)
    assert out2.shape == (B2, 1), out2.shape
    assert jnp.allclose(out2, ref2, atol=1e-5, rtol=1e-4), "mismatch vs reference (B=1000)"

    print("KERNEL_OK")
</pallas_src>

<mosaic_0001>
module attributes {stable_mosaic.version = 11 : i64} {
  func.func @adapter_kernel(%arg0: i32, %arg1: memref<128x16xf32, #tpu.memory_space<vmem>>, %arg2: memref<32x16xf32, #tpu.memory_space<vmem>>, %arg3: memref<32x1xf32, #tpu.memory_space<vmem>>, %arg4: memref<32x1xf32, #tpu.memory_space<vmem>>, %arg5: memref<1x1xf32, #tpu.memory_space<smem>>, %arg6: memref<1x128xf32, #tpu.memory_space<vmem>>) attributes {dimension_semantics = [#tpu.dimension_semantics<parallel>], iteration_bounds = array<i64: 1>, scalar_prefetch = 0 : i64, scratch_operands = 0 : i64, tpu.core_type = #tpu.core_type<tc>, window_params = [{transform_indices = @transform_0, window_bounds = array<i64: 128, 16>}, {pipeline_mode = #tpu.pipeline_mode<synchronous>, transform_indices = @transform_1, window_bounds = array<i64: 32, 16>}, {pipeline_mode = #tpu.pipeline_mode<synchronous>, transform_indices = @transform_2, window_bounds = array<i64: 32, 1>}, {pipeline_mode = #tpu.pipeline_mode<synchronous>, transform_indices = @transform_3, window_bounds = array<i64: 32, 1>}, {transform_indices = @transform_4, window_bounds = array<i64: 1, 1>}, {transform_indices = @transform_5, window_bounds = array<i64: 1, 128>}]} {
    %c0 = arith.constant 0 : index
    %c0_0 = arith.constant 0 : index
    %0 = vector.load %arg2[%c0, %c0_0] : memref<32x16xf32, #tpu.memory_space<vmem>>, vector<32x16xf32>
    %c0_1 = arith.constant 0 : index
    %c0_2 = arith.constant 0 : index
    %1 = vector.load %arg1[%c0_1, %c0_2] : memref<128x16xf32, #tpu.memory_space<vmem>>, vector<128x16xf32>
    %cst = arith.constant dense<0.000000e+00> : vector<32x128xf32>
    %2 = tpu.matmul %0, %1, %cst {dimension_numbers = #tpu.dot_dimension_numbers<[1], [1], [0], [0], [0, 0, 1, 0], [], []>} : vector<32x16xf32>, vector<128x16xf32>, vector<32x128xf32> -> vector<32x128xf32>
    %c0_3 = arith.constant 0 : index
    %c0_4 = arith.constant 0 : index
    %3 = vector.load %arg3[%c0_3, %c0_4] : memref<32x1xf32, #tpu.memory_space<vmem>>, vector<32x1xf32>
    %4 = vector.broadcast %3 : vector<32x1xf32> to vector<32x128xf32>
    %5 = arith.addf %2, %4 : vector<32x128xf32>
    %cst_5 = arith.constant 0.000000e+00 : f32
    %6 = vector.broadcast %cst_5 : f32 to vector<32x128xf32>
    %7 = arith.maximumf %5, %6 : vector<32x128xf32>
    %c0_6 = arith.constant 0 : index
    %c0_7 = arith.constant 0 : index
    %8 = vector.load %arg4[%c0_6, %c0_7] : memref<32x1xf32, #tpu.memory_space<vmem>>, vector<32x1xf32>
    %9 = vector.broadcast %8 : vector<32x1xf32> to vector<32x128xf32>
    %10 = arith.mulf %7, %9 : vector<32x128xf32>
    %cst_8 = arith.constant dense<0.000000e+00> : vector<128xf32>
    %11 = vector.multi_reduction <add>, %10, %cst_8 [0] : vector<32x128xf32> to vector<128xf32>
    %12 = vector.shape_cast %11 : vector<128xf32> to vector<1x128xf32>
    %c0_9 = arith.constant 0 : index
    %c0_10 = arith.constant 0 : index
    %13 = memref.load %arg5[%c0_9, %c0_10] : memref<1x1xf32, #tpu.memory_space<smem>>
    %14 = vector.broadcast %13 : f32 to vector<1x128xf32>
    %15 = arith.addf %12, %14 : vector<1x128xf32>
    %c0_11 = arith.constant 0 : index
    %c0_12 = arith.constant 0 : index
    %16 = vector.load %arg6[%c0_11, %c0_12] : memref<1x128xf32, #tpu.memory_space<vmem>>, vector<1x128xf32>
    tpu.vector_store %arg6[%c0_11, %c0_12], %15 {strides = array<i32>} : memref<1x128xf32, #tpu.memory_space<vmem>>, vector<1x128xf32>,
    return
  }
  func.func @transform_0(%arg0: i32) -> (i32, i32) {
    %c0_i32 = arith.constant 0 : i32
    %c0_i32_0 = arith.constant 0 : i32
    return %arg0, %c0_i32 : i32, i32
  }
  func.func @transform_1(%arg0: i32) -> (i32, i32) {
    %c0_i32 = arith.constant 0 : i32
    %c0_i32_0 = arith.constant 0 : i32
    %c0_i32_1 = arith.constant 0 : i32
    return %c0_i32, %c0_i32_0 : i32, i32
  }
  func.func @transform_2(%arg0: i32) -> (i32, i32) {
    %c0_i32 = arith.constant 0 : i32
    %c0_i32_0 = arith.constant 0 : i32
    %c0_i32_1 = arith.constant 0 : i32
    return %c0_i32, %c0_i32_0 : i32, i32
  }
  func.func @transform_3(%arg0: i32) -> (i32, i32) {
    %c0_i32 = arith.constant 0 : i32
    %c0_i32_0 = arith.constant 0 : i32
    %c0_i32_1 = arith.constant 0 : i32
    return %c0_i32, %c0_i32_0 : i32, i32
  }
  func.func @transform_4(%arg0: i32) -> (i32, i32) {
    %c0_i32 = arith.constant 0 : i32
    %c0_i32_0 = arith.constant 0 : i32
    %c0_i32_1 = arith.constant 0 : i32
    return %c0_i32, %c0_i32_0 : i32, i32
  }
  func.func @transform_5(%arg0: i32) -> (i32, i32) {
    %c0_i32 = arith.constant 0 : i32
    %c0_i32_0 = arith.constant 0 : i32
    return %c0_i32, %arg0 : i32, i32
  }
}

</mosaic_0001>

<llo_original>
// kernel: small_business_adapter.1
$region0: #{small_business_adapter.1}
  #allocation0 [shape = 'u32[]', space=smem, size = 0x4, offset = 0x4, fixed_abs, tag = 'smem constant byte address 0x4 - core index']
  #allocation1 [shape = 'u32[144,128]{1,0:T(1,128)}', space=vmem, size = 0x12000, scoped, tag = 'internal scratch']
  #allocation2 [shape = 'f32[1,1]{1,0:T(1,128)S(6)}', space=smem, size = 0x200, scoped, tag = 'scoped memory for small_business_adapter.1']
  %s0 = inlined_call_operand.vmem [shape: f32[8,16], index: 0, kind: input, shape index: {}]
  %s1 = inlined_call_operand.vmem [shape: f32[32,16], index: 1, kind: input, shape index: {}]
  %s2 = inlined_call_operand.vmem [shape: f32[32,1], index: 2, kind: input, shape index: {}]
  %s3 = inlined_call_operand.vmem [shape: f32[32,1], index: 3, kind: input, shape index: {}]
  %s4 = inlined_call_operand.<no memory space> [shape: f32[1,1], index: 4, kind: input, shape index: {}]
  %s5 = inlined_call_operand.hbm [shape: f32[1,8], index: 5, kind: output, shape index: {}]
  %s6 = sld [smem:[#allocation0]]
  $region30: #{small_business_adapter.1} parent=0
    _
  %s8 = ssub.s32 1, %s6
  %s9 = scalar_select 0, %s8, %s6
  %10 = sst [smem:[#allocation2]] %s4
  $region1: #{small_business_adapter.1} parent=0
    #allocation3 [shape = 'u8[512]{0}', space=vmem, size = 0x400, scoped, tag = 'output window, operand 0, single buffered']
    #allocation4 [shape = 's32[1]{0}', space=sflag, size = 0x4, scoped, tag = 'scoped memory for small_business_adapter.1']
    %11 = vsyncpa [#allocation4], 0
    // Predicated region
    $region2: #{small_business_adapter.1} parent=1 // pred_check
      _
    $region3: #{small_business_adapter.1} parent=1 // pred_check_branch
      %13 = sbr.rel (0) target = $region5
    $region4: #{small_business_adapter.1} parent=1 // pred_region
      _
    $region5: #{small_business_adapter.1} parent=1 // pred_fallthru
      _
    // Predicated region
    $region6: #{small_business_adapter.1} parent=1 // pred_check
      _
    $region7: #{small_business_adapter.1} parent=1 // pred_check_branch
      %15 = sbr.rel (0) target = $region9
    $region8: #{small_business_adapter.1} parent=1 // pred_region
      _
    $region9: #{small_business_adapter.1} parent=1 // pred_fallthru
      _
    // Predicated region
    $region10: #{small_business_adapter.1} parent=1 // pred_check
      _
    $region11: #{small_business_adapter.1} parent=1 // pred_check_branch
      %17 = sbr.rel (0) target = $region13
    $region12: #{small_business_adapter.1} parent=1 // pred_region
      _
    $region13: #{small_business_adapter.1} parent=1 // pred_fallthru
      _
    // Predicated region
    $region14: #{small_business_adapter.1} parent=1 // pred_check
      _
    $region15: #{small_business_adapter.1} parent=1 // pred_check_branch
      %19 = sbr.rel (0) target = $region17
    $region16: #{small_business_adapter.1} parent=1 // pred_region
      _
    $region17: #{small_business_adapter.1} parent=1 // pred_fallthru
      _
    // Predicated region
    $region18: #{small_business_adapter.1} parent=1 // pred_check
      _
    $region19: #{small_business_adapter.1} parent=1 // pred_check_branch
      %21 = sbr.rel (0) target = $region21
    $region20: #{small_business_adapter.1} parent=1 // pred_region
      _
    $region21: #{small_business_adapter.1} parent=1 // pred_fallthru
      _
    %v22 = vld [vmem:[%s1] sm:$0xff]
    %v23 = vld [vmem:[%s1 + $0x8] sm:$0xff]
    %v24 = vld [vmem:[%s1 + $0x10] sm:$0xff]
    %v25 = vld [vmem:[%s1 + $0x18] sm:$0xff]
    %v26 = vld [vmem:[%s0] sm:$0xff]
    %v27 = vld [vmem:[%s0 + $0x8] sm:$0xff]
    %v28 = vld [vmem:[%s0 + $0x10] sm:$0xff]
    %v29 = vld [vmem:[%s0 + $0x18] sm:$0xff]
    %v30 = vld [vmem:[%s0 + $0x20] sm:$0xff]
    %v31 = vld [vmem:[%s0 + $0x28] sm:$0xff]
    %v32 = vld [vmem:[%s0 + $0x30] sm:$0xff]
    %v33 = vld [vmem:[%s0 + $0x38] sm:$0xff]
    %v34 = vld [vmem:[%s0 + $0x40] sm:$0xff]
    %v35 = vld [vmem:[%s0 + $0x48] sm:$0xff]
    %v36 = vld [vmem:[%s0 + $0x50] sm:$0xff]
    %v37 = vld [vmem:[%s0 + $0x58] sm:$0xff]
    %v38 = vld [vmem:[%s0 + $0x60] sm:$0xff]
    %v39 = vld [vmem:[%s0 + $0x68] sm:$0xff]
    %v40 = vld [vmem:[%s0 + $0x70] sm:$0xff]
    %v41 = vld [vmem:[%s0 + $0x78] sm:$0xff]
    %v42 = vld [vmem:[%s2] sm:$0xff]
    %v43 = vld [vmem:[%s2 + $0x8] sm:$0xff]
    %v44 = vld [vmem:[%s2 + $0x10] sm:$0xff]
    %v45 = vld [vmem:[%s2 + $0x18] sm:$0xff]
    %47 = vset.pattern.permute.xlu0 0
    %48 = vperm.xlu0 %47, %v42
    %v49 = vpop.permute.xlu0 %48
    %52 = vset.pattern.permute.xlu0 0
    %53 = vperm.xlu0 %52, %v43
    %v54 = vpop.permute.xlu0 %53
    %57 = vset.pattern.permute.xlu0 0
    %58 = vperm.xlu0 %57, %v44
    %v59 = vpop.permute.xlu0 %58
    %62 = vset.pattern.permute.xlu0 0
    %63 = vperm.xlu0 %62, %v45
    %v64 = vpop.permute.xlu0 %63
    %vm66 = vcmask 130048
    %v68 = vsel %vm66, %v22, 0
    %v71 = vsel %vm66, %v23, 0
    %v74 = vsel %vm66, %v24, 0
    %v77 = vsel %vm66, %v25, 0
    %v80 = vsel %vm66, %v26, 0
    %v83 = vsel %vm66, %v27, 0
    %v86 = vsel %vm66, %v28, 0
    %v89 = vsel %vm66, %v29, 0
    %v92 = vsel %vm66, %v30, 0
    %v95 = vsel %vm66, %v31, 0
    %v98 = vsel %vm66, %v32, 0
    %v101 = vsel %vm66, %v33, 0
    %v104 = vsel %vm66, %v34, 0
    %v107 = vsel %vm66, %v35, 0
    %v110 = vsel %vm66, %v36, 0
    %v113 = vsel %vm66, %v37, 0
    %v116 = vsel %vm66, %v38, 0
    %v119 = vsel %vm66, %v39, 0
    %v122 = vsel %vm66, %v40, 0
    %v125 = vsel %vm66, %v41, 0
    %127 = vmatprep.subr.mxu0 0.0
    %128 = vmatpush1.xpose.msra.mxu0 %v80
    %129 = vmatprep.subr.mxu0 0.0
    %130 = vmatpush1.xpose.msra.mxu0 %v83
    %131 = vmatprep.subr.mxu0 0.0
    %132 = vmatpush1.xpose.msra.mxu0 %v86
    %133 = vmatprep.subr.mxu0 0.0
    %134 = vmatpush1.xpose.msra.mxu0 %v89
    %135 = vmatprep.subr.mxu0 0.0
    %136 = vmatpush1.xpose.msra.mxu0 %v92
    %137 = vmatprep.subr.mxu0 0.0
    %138 = vmatpush1.xpose.msra.mxu0 %v95
    %139 = vmatprep.subr.mxu0 0.0
    %140 = vmatpush1.xpose.msra.mxu0 %v98
    %141 = vmatprep.subr.mxu0 0.0
    %142 = vmatpush1.xpose.msra.mxu0 %v101
    %143 = vmatprep.subr.mxu0 0.0
    %144 = vmatpush1.xpose.msra.mxu0 %v104
    %145 = vmatprep.subr.mxu0 0.0
    %146 = vmatpush1.xpose.msra.mxu0 %v107
    %147 = vmatprep.subr.mxu0 0.0
    %148 = vmatpush1.xpose.msra.mxu0 %v110
    %149 = vmatprep.subr.mxu0 0.0
    %150 = vmatpush1.xpose.msra.mxu0 %v113
    %151 = vmatprep.subr.mxu0 0.0
    %152 = vmatpush1.xpose.msra.mxu0 %v116
    %153 = vmatprep.subr.mxu0 0.0
    %154 = vmatpush1.xpose.msra.mxu0 %v119
    %155 = vmatprep.subr.mxu0 0.0
    %156 = vmatpush1.xpose.msra.mxu0 %v122
    %157 = vmatprep.subr.mxu0 0.0
    %158 = vmatpush1.xpose.msra.mxu0 %v125
    %159 = vmatprep.subr.mxu0 0.0
    %160 = vmatpush1.xpose.msra.mxu0 0.0
    %161 = vmatprep.subr.mxu0 0.0
    %162 = vmatpush1.xpose.msra.mxu0 0.0
    %163 = vmatprep.subr.mxu0 0.0
    %164 = vmatpush1.xpose.msra.mxu0 0.0
    %165 = vmatprep.subr.mxu0 0.0
    %166 = vmatpush1.xpose.msra.mxu0 0.0
    %167 = vmatprep.subr.mxu0 0.0
    %168 = vmatpush1.xpose.msra.mxu0 0.0
    %169 = vmatprep.subr.mxu0 0.0
    %170 = vmatpush1.xpose.msra.mxu0 0.0
    %171 = vmatprep.subr.mxu0 0.0
    %172 = vmatpush1.xpose.msra.mxu0 0.0
    %173 = vmatprep.subr.mxu0 0.0
    %174 = vmatpush1.xpose.msra.mxu0 0.0
    %175 = vmatprep.subr.mxu0 0.0
    %176 = vmatpush1.xpose.msra.mxu0 0.0
    %177 = vmatprep.subr.mxu0 0.0
    %178 = vmatpush1.xpose.msra.mxu0 0.0
    %179 = vmatprep.subr.mxu0 0.0
    %180 = vmatpush1.xpose.msra.mxu0 0.0
    %181 = vmatprep.subr.mxu0 0.0
    %182 = vmatpush1.xpose.msra.mxu0 0.0
    %183 = vmatprep.subr.mxu0 0.0
    %184 = vmatpush1.xpose.msra.mxu0 0.0
    %185 = vmatprep.subr.mxu0 0.0
    %186 = vmatpush1.xpose.msra.mxu0 0.0
    %187 = vmatprep.subr.mxu0 0.0
    %188 = vmatpush1.xpose.msra.mxu0 0.0
    %189 = vmatprep.subr.mxu0 0.0
    %190 = vmatpush1.xpose.msra.mxu0 0.0
    %191 = vmatprep.mubr.f32.mxu0 0.0
    %192 = vmatmul.mubr.f32.gmra.mrb[0].mxu0 %v68
    %v193 = vpop.f32.mrb[0].mxu0
    %v194 = vadd.f32 %v49, %v193
    %v195 = vpop.f32.mrb[0].mxu0
    %196 = vmatprep.mubr.f32.mxu0 0.0
    %197 = vmatmul.mubr.f32.gmra.mrb[0].mxu0 %v71
    %v198 = vpop.f32.mrb[0].mxu0
    %v199 = vadd.f32 %v54, %v198
    %v200 = vpop.f32.mrb[0].mxu0
    %201 = vmatprep.mubr.f32.mxu0 0.0
    %202 = vmatmul.mubr.f32.gmra.mrb[0].mxu0 %v74
    %v203 = vpop.f32.mrb[0].mxu0
    %v204 = vadd.f32 %v59, %v203
    %v205 = vpop.f32.mrb[0].mxu0
    %206 = vmatprep.mubr.f32.mxu0 0.0
    %207 = vmatmul.mubr.f32.gmra.mrb[0].mxu0 %v77
    %v208 = vpop.f32.mrb[0].mxu0
    %v209 = vadd.f32 %v64, %v208
    %v210 = vpop.f32.mrb[0].mxu0
    %211 = vdwg.mxu0
    %v212 = vmax.f32 %v194, 0.0
    %v213 = vmax.f32 %v199, 0.0
    %v214 = vmax.f32 %v204, 0.0
    %v215 = vmax.f32 %v209, 0.0
    %v216 = vld [vmem:[%s3] sm:$0xff]
    %v217 = vld [vmem:[%s3 + $0x8] sm:$0xff]
    %v218 = vld [vmem:[%s3 + $0x10] sm:$0xff]
    %v219 = vld [vmem:[%s3 + $0x18] sm:$0xff]
    %221 = vset.pattern.permute.xlu0 0
    %222 = vperm.xlu0 %221, %v216
    %v223 = vpop.permute.xlu0 %222
    %226 = vset.pattern.permute.xlu0 0
    %227 = vperm.xlu0 %226, %v217
    %v228 = vpop.permute.xlu0 %227
    %231 = vset.pattern.permute.xlu0 0
    %232 = vperm.xlu0 %231, %v218
    %v233 = vpop.permute.xlu0 %232
    %236 = vset.pattern.permute.xlu0 0
    %237 = vperm.xlu0 %236, %v219
    %v238 = vpop.permute.xlu0 %237
    %v240 = vmul.f32 %v212, %v223
    %v241 = vmul.f32 %v213, %v228
    %v242 = vmul.f32 %v214, %v233
    %v243 = vmul.f32 %v215, %v238
    %v244 = vadd.f32 %v240, %v241
    %v245 = vadd.f32 %v244, %v242
    %v246 = vadd.f32 %v245, %v243
    %v247 = vrot.slane %v246, 4
    %v248 = vadd.f32 %v246, %v247
    %v249 = vrot.slane %v248, 2
    %v250 = vadd.f32 %v248, %v249
    %v251 = vrot.slane %v250, 1
    %v252 = vadd.f32 %v250, %v251
    %s253 = sld [smem:[#allocation2]]
    %v254 = vstv %s253
    %v255 = vadd.f32 %v252, %v254
    %256 = vst [vmem:[#allocation3] sm:$0x1] %v255
    // Predicated region
    $region22: #{small_business_adapter.1} parent=1 // pred_check
      _
    $region23: #{small_business_adapter.1} parent=1 // pred_check_branch
      %258 = sbr.rel (0) target = $region25
    $region24: #{small_business_adapter.1} parent=1 // pred_region
      %s260 = ssub.s32 16, 16
      %261 = vsyncadd [#allocation4], %s260
      %s263 = sshll.u32 [#allocation3], 4
      %s264 = int_to_ptr.vmem [resolvable:$true] %s263
      %266 = dma.vmem_to_hbm [thread:$0]  %s264, 16, %s5, [#allocation4]
    $region25: #{small_business_adapter.1} parent=1 // pred_fallthru
      _
    // Predicated region
    $region26: #{small_business_adapter.1} parent=1 // pred_check
      _
    $region27: #{small_business_adapter.1} parent=1 // pred_check_branch
      %268 = sbr.rel (0) target = $region29
    $region28: #{small_business_adapter.1} parent=1 // pred_region
      %269 = dma.done [#allocation4], 16
    $region29: #{small_business_adapter.1} parent=1 // pred_fallthru
      _
    %270 = vsyncpa [#allocation4], 1

</llo_original>
